<compile_context>
chip_gen: v5e
topology: v5e:2x2
jax: 0.10.0
libtpu: 0.0.40
codegen_flags: <defaults>
</compile_context>

<pallas_src>
import functools

import jax
import jax.numpy as jnp
from jax import lax
from jax.experimental import pallas as pl
from jax.experimental.pallas import tpu as pltpu


def _round_up(x, m):
    return (x + m - 1) // m * m


def _vmem_limit_bytes():
    """Per-TensorCore VMEM limit to request: ~3/4 of physical capacity."""
    try:
        cap = int(pltpu.get_tpu_info().vmem_capacity_bytes)
    except Exception:
        cap = 64 << 20          # conservative (v7x per-core physical)
    cap = max(cap, 32 << 20)
    return min((cap * 3) // 4, 112 << 20)   # 96 MiB on v5e/v6e, 48 MiB on v7x


def _choose_tile_n(n, kp, dp, *, x_bytes, budget_bytes, single_buffer_resident):
    """Pick TILE_N (multiple of 8, >=128 when possible) within the VMEM budget."""
    cb_bufs = 1 if single_buffer_resident else 2
    # Resident (grid-invariant): bf16 hi + lo codebook and f32 ||e||^2.
    resident = cb_bufs * (2 * kp * dp * 2 + kp * 4)
    avail = max(budget_bytes - resident, 1 << 20)
    # Per-row live bytes: pipelined x/q tiles (2 bufs each) + f32/bf16 x temps
    # + ~4 (row, Kp) f32/i32 temporaries (cross/dist/iota/select) + bf16 one_hot.
    per_row = 4 * dp * x_bytes + 16 * dp + 20 * kp + 64
    tile = (avail // per_row) // 8 * 8
    cap = 1024 if kp <= 1024 else 512
    tile = max(min(tile, cap), 128)          # MXU row floor (see K-axis TODO)
    tile = min(tile, _round_up(n, 8))        # never exceed the (8-aligned) problem
    return int(max(tile, 8))


def _make_vq_kernel(beta, true_d):
    scale = (1.0 + beta) / float(true_d)

    def kernel(x_ref, ehi_ref, elo_ref, e2_ref, q_ref, loss_ref, ind_ref):
        x = x_ref[...].astype(jnp.float32)        # (TILE_N, Dp)
        e_hi = ehi_ref[...]                       # (Kp, Dp) bf16 (resident)
        e_lo = elo_ref[...]                       # (Kp, Dp) bf16 (resident)
        e2 = e2_ref[...]                          # (1, Kp) f32, pad rows = +huge

        # argmin_k ||x - e_k||^2 == argmin_k (||e_k||^2 - 2 <x, e_k>).
        # Fold the -2 into the (cheap) bf16 cast of x; cross term on the MXU
        # with bf16 inputs / f32 accumulation (distances only feed the argmin;
        # near-tied rows can flip vs. pure f32 -- documented caveat).
        xm2 = (x * -2.0).astype(jnp.bfloat16)                       # exact scale
        cross = lax.dot_general(
            xm2, e_hi, (((1,), (1,)), ((), ())),
            preferred_element_type=jnp.float32)                     # (TILE_N, Kp)
        dist = e2 + cross                                           # (TILE_N, Kp)

        # argmin over K (first index of the minimum, like torch.argmin).
        kp = dist.shape[1]
        min_d = jnp.min(dist, axis=1, keepdims=True)                # (TILE_N, 1)
        iota_k = lax.broadcasted_iota(jnp.int32, dist.shape, 1)     # (TILE_N, Kp)
        inds = jnp.min(jnp.where(dist <= min_d, iota_k, kp),
                       axis=1, keepdims=True)                       # (TILE_N, 1)

        # one_hot @ codebook (== gather of selected embedding rows) as two bf16
        # MXU passes with f32 accumulation; E_hi + E_lo reconstructs the f32
        # codebook rows to ~2^-16 relative accuracy.
        one_hot = (iota_k == inds).astype(jnp.bfloat16)             # (TILE_N, Kp)
        q = (jnp.dot(one_hot, e_hi, preferred_element_type=jnp.float32)
             + jnp.dot(one_hot, e_lo, preferred_element_type=jnp.float32))

        # vq_loss = embedding_loss + beta * commitment_loss
        #         = (1 + beta) * mean_d (q - x)^2   (forward value).
        # Padded D columns are zero in both q and x, so sum/D_true is exact.
        diff = q - x
        loss = scale * jnp.sum(diff * diff, axis=1, keepdims=True)  # (TILE_N, 1)

        q_ref[...] = q.astype(q_ref.dtype)
        loss_ref[...] = loss
        ind_ref[...] = inds.astype(jnp.int32)

    return kernel


@functools.partial(jax.jit, static_argnames=("beta", "single_buffer_resident"))
def _vq_forward(latents, embedding, *, beta, single_buffer_resident):
    B, T, D = latents.shape
    K, D2 = embedding.shape
    assert D == D2
    N = B * T

    Dp = _round_up(D, 128)
    Kp = _round_up(K, 128)

    vmem_limit = _vmem_limit_bytes()
    tile_n = _choose_tile_n(
        N, Kp, Dp,
        x_bytes=latents.dtype.itemsize,
        budget_bytes=int(vmem_limit * 0.85),
        single_buffer_resident=single_buffer_resident)

    # Latents stay in their native dtype.  Only pad when strictly required
    # (D not lane-aligned, or N not sublane-aligned); otherwise the reshape is
    # free and no extra HBM copies are made.
    flat = latents.reshape(N, D)
    n_rows = N if N % 8 == 0 else _round_up(N, 8)
    if n_rows != N or Dp != D:
        flat = jnp.pad(flat, ((0, n_rows - N), (0, Dp - D)))

    # Codebook: bf16 hi/lo split (resident in VMEM) + f32 ||e||^2 row.
    # Padded codebook rows get a huge ||e||^2 so they can never win the argmin.
    e_f32 = embedding.astype(jnp.float32)
    if Dp != D or Kp != K:
        e_f32 = jnp.pad(e_f32, ((0, Kp - K), (0, Dp - D)))
    e_hi = e_f32.astype(jnp.bfloat16)
    e_lo = (e_f32 - e_hi.astype(jnp.float32)).astype(jnp.bfloat16)
    e2 = jnp.sum(e_f32 * e_f32, axis=1)
    if Kp != K:
        e2 = jnp.where(jnp.arange(Kp) < K, e2, jnp.float32(1e30))
    e2 = e2.reshape(1, Kp)

    def resident_spec(shape):
        if single_buffer_resident:
            # Constant index_map -> double-buffering is pure VMEM waste.
            return pl.BlockSpec(shape, lambda i: (0, 0),
                                pipeline_mode=pl.Buffered(1))
        return pl.BlockSpec(shape, lambda i: (0, 0))

    num_tiles = pl.cdiv(n_rows, tile_n)

    q_pad, loss_pad, ind_pad = pl.pallas_call(
        _make_vq_kernel(beta, D),
        grid=(num_tiles,),
        in_specs=[
            pl.BlockSpec((tile_n, Dp), lambda i: (i, 0)),   # latents tile
            resident_spec((Kp, Dp)),                        # codebook hi (bf16)
            resident_spec((Kp, Dp)),                        # codebook lo (bf16)
            resident_spec((1, Kp)),                         # ||e||^2 (f32)
        ],
        out_specs=(
            pl.BlockSpec((tile_n, Dp), lambda i: (i, 0)),
            pl.BlockSpec((tile_n, 1), lambda i: (i, 0)),
            pl.BlockSpec((tile_n, 1), lambda i: (i, 0)),
        ),
        out_shape=(
            jax.ShapeDtypeStruct((n_rows, Dp), latents.dtype),
            jax.ShapeDtypeStruct((n_rows, 1), jnp.float32),
            jax.ShapeDtypeStruct((n_rows, 1), jnp.int32),
        ),
        compiler_params=pltpu.CompilerParams(
            dimension_semantics=("parallel",),
            vmem_limit_bytes=int(vmem_limit)),
    )(flat, e_hi, e_lo, e2)

    if n_rows != N or Dp != D:
        q_flat = q_pad[:N, :D]
        loss_flat = loss_pad[:N, 0]
        ind_flat = ind_pad[:N, 0]
    else:
        q_flat = q_pad
        loss_flat = loss_pad[:, 0]
        ind_flat = ind_pad[:, 0]

    quantized = q_flat.reshape(B, T, D)
    vq_loss = loss_flat.reshape(B, T)
    encoding_inds = ind_flat.reshape(1, N)   # == encoding_inds.t()
    return quantized, vq_loss, encoding_inds


_SINGLE_BUFFER_RESIDENT_OK = True


def vector_quantizer_forward(latents, embedding, beta=0.25):
    """latents: (B, T, D) float, embedding: (K, D) float."""
    global _SINGLE_BUFFER_RESIDENT_OK
    if _SINGLE_BUFFER_RESIDENT_OK:
        try:
            return _vq_forward(latents, embedding, beta=beta,
                               single_buffer_resident=True)
        except Exception:
            # pipeline_mode=pl.Buffered(1) not supported by this jax/libtpu:
            # fall back to default double-buffered resident codebook.
            _SINGLE_BUFFER_RESIDENT_OK = False
    return _vq_forward(latents, embedding, beta=beta,
                       single_buffer_resident=False)


if __name__ == "__main__":
    # Small shapes consistent with the module: (batch, t, emb_dim), codebook K.
    B, T, D, K = 2, 8, 32, 64
    beta = 0.25

    key = jax.random.PRNGKey(0)
    k_lat, k_emb = jax.random.split(key)
    latents = jax.random.normal(k_lat, (B, T, D), dtype=jnp.float32)
    # nn.Embedding(K, D).weight.data.uniform_(-1/K, 1/K)
    embedding = jax.random.uniform(
        k_emb, (K, D), dtype=jnp.float32, minval=-1.0 / K, maxval=1.0 / K)

    quantized, vq_loss, encoding_inds = vector_quantizer_forward(
        latents, embedding, beta=beta)
    jax.block_until_ready((quantized, vq_loss, encoding_inds))

    assert quantized.shape == (B, T, D)
    assert vq_loss.shape == (B, T)
    assert encoding_inds.shape == (1, B * T)

    # Internal consistency: quantized rows are the selected codebook rows and
    # vq_loss matches (1 + beta) * mean_d (q - x)^2.
    q_flat = quantized.reshape(B * T, D)
    gathered = embedding[encoding_inds[0]]
    assert jnp.allclose(q_flat, gathered, rtol=0.0, atol=5e-4)
    ref_loss = (1.0 + beta) * jnp.mean(
        (q_flat - latents.reshape(B * T, D)) ** 2, axis=-1)
    assert jnp.allclose(vq_loss.reshape(-1), ref_loss, rtol=1e-4, atol=1e-6)

    print("KERNEL_OK")
</pallas_src>

<mosaic_0001>
module attributes {stable_mosaic.version = 11 : i64} {
  func.func @kernel(%arg0: i32, %arg1: memref<16x128xf32, #tpu.memory_space<vmem>>, %arg2: memref<128x128xbf16, #tpu.memory_space<vmem>>, %arg3: memref<128x128xbf16, #tpu.memory_space<vmem>>, %arg4: memref<1x128xf32, #tpu.memory_space<vmem>>, %arg5: memref<16x128xf32, #tpu.memory_space<vmem>>, %arg6: memref<16x1xf32, #tpu.memory_space<vmem>>, %arg7: memref<16x1xi32, #tpu.memory_space<vmem>>) attributes {dimension_semantics = [#tpu.dimension_semantics<parallel>], iteration_bounds = array<i64: 1>, scalar_prefetch = 0 : i64, scratch_operands = 0 : i64, tpu.core_type = #tpu.core_type<tc>, window_params = [{transform_indices = @transform_0, window_bounds = array<i64: 16, 128>}, {pipeline_mode = #tpu.pipeline_mode<synchronous>, transform_indices = @transform_1, window_bounds = array<i64: 128, 128>}, {pipeline_mode = #tpu.pipeline_mode<synchronous>, transform_indices = @transform_2, window_bounds = array<i64: 128, 128>}, {pipeline_mode = #tpu.pipeline_mode<synchronous>, transform_indices = @transform_3, window_bounds = array<i64: 1, 128>}, {transform_indices = @transform_4, window_bounds = array<i64: 16, 128>}, {transform_indices = @transform_5, window_bounds = array<i64: 16, 1>}, {transform_indices = @transform_6, window_bounds = array<i64: 16, 1>}]} {
    %c0 = arith.constant 0 : index
    %c0_0 = arith.constant 0 : index
    %0 = vector.load %arg1[%c0, %c0_0] : memref<16x128xf32, #tpu.memory_space<vmem>>, vector<16x128xf32>
    %c0_1 = arith.constant 0 : index
    %c0_2 = arith.constant 0 : index
    %1 = vector.load %arg2[%c0_1, %c0_2] : memref<128x128xbf16, #tpu.memory_space<vmem>>, vector<128x128xbf16>
    %c0_3 = arith.constant 0 : index
    %c0_4 = arith.constant 0 : index
    %2 = vector.load %arg3[%c0_3, %c0_4] : memref<128x128xbf16, #tpu.memory_space<vmem>>, vector<128x128xbf16>
    %c0_5 = arith.constant 0 : index
    %c0_6 = arith.constant 0 : index
    %3 = vector.load %arg4[%c0_5, %c0_6] : memref<1x128xf32, #tpu.memory_space<vmem>>, vector<1x128xf32>
    %cst = arith.constant -2.000000e+00 : f32
    %4 = vector.broadcast %cst : f32 to vector<16x128xf32>
    %5 = arith.mulf %0, %4 : vector<16x128xf32>
    %6 = arith.truncf %5 : vector<16x128xf32> to vector<16x128xbf16>
    %cst_7 = arith.constant dense<0.000000e+00> : vector<16x128xf32>
    %7 = tpu.matmul %6, %1, %cst_7 {dimension_numbers = #tpu.dot_dimension_numbers<[1], [1], [0], [0], [0, 0, 1, 0], [], []>} : vector<16x128xbf16>, vector<128x128xbf16>, vector<16x128xf32> -> vector<16x128xf32>
    %8 = vector.broadcast %3 : vector<1x128xf32> to vector<16x128xf32>
    %9 = arith.addf %8, %7 : vector<16x128xf32>
    %cst_8 = arith.constant dense<0x7F800000> : vector<16xf32>
    %10 = vector.multi_reduction <minimumf>, %9, %cst_8 [1] : vector<16x128xf32> to vector<16xf32>
    %11 = vector.shape_cast %10 : vector<16xf32> to vector<16x1xf32>
    %12 = tpu.iota {dimensions = array<i32: 1>} : vector<16x128xi32>
    %13 = vector.broadcast %11 : vector<16x1xf32> to vector<16x128xf32>
    %14 = arith.cmpf ole, %9, %13 : vector<16x128xf32>
    %c128_i32 = arith.constant 128 : i32
    %15 = vector.broadcast %c128_i32 : i32 to vector<16x128xi32>
    %16 = arith.select %14, %12, %15 : vector<16x128xi1>, vector<16x128xi32>
    %cst_9 = arith.constant dense<2147483647> : vector<16xi32>
    %17 = vector.multi_reduction <minsi>, %16, %cst_9 [1] : vector<16x128xi32> to vector<16xi32>
    %18 = vector.shape_cast %17 : vector<16xi32> to vector<16x1xi32>
    %19 = vector.broadcast %18 : vector<16x1xi32> to vector<16x128xi32>
    %20 = arith.cmpi eq, %12, %19 : vector<16x128xi32>
    %21 = arith.extui %20 : vector<16x128xi1> to vector<16x128xi32>
    %22 = arith.sitofp %21 : vector<16x128xi32> to vector<16x128xf32>
    %23 = arith.truncf %22 : vector<16x128xf32> to vector<16x128xbf16>
    %cst_10 = arith.constant dense<0.000000e+00> : vector<16x128xf32>
    %24 = tpu.matmul %23, %1, %cst_10 {dimension_numbers = #tpu.dot_dimension_numbers<[1], [0], [0], [1], [0, 0, 1, 1], [], []>} : vector<16x128xbf16>, vector<128x128xbf16>, vector<16x128xf32> -> vector<16x128xf32>
    %cst_11 = arith.constant dense<0.000000e+00> : vector<16x128xf32>
    %25 = tpu.matmul %23, %2, %cst_11 {dimension_numbers = #tpu.dot_dimension_numbers<[1], [0], [0], [1], [0, 0, 1, 1], [], []>} : vector<16x128xbf16>, vector<128x128xbf16>, vector<16x128xf32> -> vector<16x128xf32>
    %26 = arith.addf %24, %25 : vector<16x128xf32>
    %27 = arith.subf %26, %0 : vector<16x128xf32>
    %28 = arith.mulf %27, %27 : vector<16x128xf32>
    %cst_12 = arith.constant dense<0.000000e+00> : vector<16xf32>
    %29 = vector.multi_reduction <add>, %28, %cst_12 [1] : vector<16x128xf32> to vector<16xf32>
    %30 = vector.shape_cast %29 : vector<16xf32> to vector<16x1xf32>
    %cst_13 = arith.constant 3.906250e-02 : f32
    %31 = vector.broadcast %cst_13 : f32 to vector<16x1xf32>
    %32 = arith.mulf %31, %30 : vector<16x1xf32>
    %c0_14 = arith.constant 0 : index
    %c0_15 = arith.constant 0 : index
    %33 = vector.load %arg5[%c0_14, %c0_15] : memref<16x128xf32, #tpu.memory_space<vmem>>, vector<16x128xf32>
    tpu.vector_store %arg5[%c0_14, %c0_15], %26 {strides = array<i32>} : memref<16x128xf32, #tpu.memory_space<vmem>>, vector<16x128xf32>,
    %c0_16 = arith.constant 0 : index
    %c0_17 = arith.constant 0 : index
    %34 = vector.load %arg6[%c0_16, %c0_17] : memref<16x1xf32, #tpu.memory_space<vmem>>, vector<16x1xf32>
    tpu.vector_store %arg6[%c0_16, %c0_17], %32 {strides = array<i32>} : memref<16x1xf32, #tpu.memory_space<vmem>>, vector<16x1xf32>,
    %c0_18 = arith.constant 0 : index
    %c0_19 = arith.constant 0 : index
    %35 = vector.load %arg7[%c0_18, %c0_19] : memref<16x1xi32, #tpu.memory_space<vmem>>, vector<16x1xi32>
    tpu.vector_store %arg7[%c0_18, %c0_19], %18 {strides = array<i32>} : memref<16x1xi32, #tpu.memory_space<vmem>>, vector<16x1xi32>,
    return
  }
  func.func @transform_0(%arg0: i32) -> (i32, i32) {
    %c0_i32 = arith.constant 0 : i32
    %c0_i32_0 = arith.constant 0 : i32
    return %arg0, %c0_i32 : i32, i32
  }
  func.func @transform_1(%arg0: i32) -> (i32, i32) {
    %c0_i32 = arith.constant 0 : i32
    %c0_i32_0 = arith.constant 0 : i32
    %c0_i32_1 = arith.constant 0 : i32
    return %c0_i32, %c0_i32_0 : i32, i32
  }
  func.func @transform_2(%arg0: i32) -> (i32, i32) {
    %c0_i32 = arith.constant 0 : i32
    %c0_i32_0 = arith.constant 0 : i32
    %c0_i32_1 = arith.constant 0 : i32
    return %c0_i32, %c0_i32_0 : i32, i32
  }
  func.func @transform_3(%arg0: i32) -> (i32, i32) {
    %c0_i32 = arith.constant 0 : i32
    %c0_i32_0 = arith.constant 0 : i32
    %c0_i32_1 = arith.constant 0 : i32
    return %c0_i32, %c0_i32_0 : i32, i32
  }
  func.func @transform_4(%arg0: i32) -> (i32, i32) {
    %c0_i32 = arith.constant 0 : i32
    %c0_i32_0 = arith.constant 0 : i32
    return %arg0, %c0_i32 : i32, i32
  }
  func.func @transform_5(%arg0: i32) -> (i32, i32) {
    %c0_i32 = arith.constant 0 : i32
    %c0_i32_0 = arith.constant 0 : i32
    return %arg0, %c0_i32 : i32, i32
  }
  func.func @transform_6(%arg0: i32) -> (i32, i32) {
    %c0_i32 = arith.constant 0 : i32
    %c0_i32_0 = arith.constant 0 : i32
    return %arg0, %c0_i32 : i32, i32
  }
}

module attributes {stable_mosaic.version = 11 : i64} {
  func.func @kernel(%arg0: i32, %arg1: memref<16x128xf32, #tpu.memory_space<vmem>>, %arg2: memref<128x128xbf16, #tpu.memory_space<vmem>>, %arg3: memref<128x128xbf16, #tpu.memory_space<vmem>>, %arg4: memref<1x128xf32, #tpu.memory_space<vmem>>, %arg5: memref<16x128xf32, #tpu.memory_space<vmem>>, %arg6: memref<16x1xf32, #tpu.memory_space<vmem>>, %arg7: memref<16x1xi32, #tpu.memory_space<vmem>>) attributes {dimension_semantics = [#tpu.dimension_semantics<parallel>], iteration_bounds = array<i64: 1>, scalar_prefetch = 0 : i64, scratch_operands = 0 : i64, tpu.core_type = #tpu.core_type<tc>, window_params = [{transform_indices = @transform_0, window_bounds = array<i64: 16, 128>}, {pipeline_mode = #tpu.pipeline_mode<synchronous>, transform_indices = @transform_1, window_bounds = array<i64: 128, 128>}, {pipeline_mode = #tpu.pipeline_mode<synchronous>, transform_indices = @transform_2, window_bounds = array<i64: 128, 128>}, {pipeline_mode = #tpu.pipeline_mode<synchronous>, transform_indices = @transform_3, window_bounds = array<i64: 1, 128>}, {transform_indices = @transform_4, window_bounds = array<i64: 16, 128>}, {transform_indices = @transform_5, window_bounds = array<i64: 16, 1>}, {transform_indices = @transform_6, window_bounds = array<i64: 16, 1>}]} {
    %c0 = arith.constant 0 : index
    %c0_0 = arith.constant 0 : index
    %0 = vector.load %arg1[%c0, %c0_0] : memref<16x128xf32, #tpu.memory_space<vmem>>, vector<16x128xf32>
    %c0_1 = arith.constant 0 : index
    %c0_2 = arith.constant 0 : index
    %1 = vector.load %arg2[%c0_1, %c0_2] : memref<128x128xbf16, #tpu.memory_space<vmem>>, vector<128x128xbf16>
    %c0_3 = arith.constant 0 : index
    %c0_4 = arith.constant 0 : index
    %2 = vector.load %arg3[%c0_3, %c0_4] : memref<128x128xbf16, #tpu.memory_space<vmem>>, vector<128x128xbf16>
    %c0_5 = arith.constant 0 : index
    %c0_6 = arith.constant 0 : index
    %3 = vector.load %arg4[%c0_5, %c0_6] : memref<1x128xf32, #tpu.memory_space<vmem>>, vector<1x128xf32>
    %cst = arith.constant -2.000000e+00 : f32
    %4 = vector.broadcast %cst : f32 to vector<16x128xf32>
    %5 = arith.mulf %0, %4 : vector<16x128xf32>
    %6 = arith.truncf %5 : vector<16x128xf32> to vector<16x128xbf16>
    %cst_7 = arith.constant dense<0.000000e+00> : vector<16x128xf32>
    %7 = tpu.matmul %6, %1, %cst_7 {dimension_numbers = #tpu.dot_dimension_numbers<[1], [1], [0], [0], [0, 0, 1, 0], [], []>} : vector<16x128xbf16>, vector<128x128xbf16>, vector<16x128xf32> -> vector<16x128xf32>
    %8 = vector.broadcast %3 : vector<1x128xf32> to vector<16x128xf32>
    %9 = arith.addf %8, %7 : vector<16x128xf32>
    %cst_8 = arith.constant dense<0x7F800000> : vector<16xf32>
    %10 = vector.multi_reduction <minimumf>, %9, %cst_8 [1] : vector<16x128xf32> to vector<16xf32>
    %11 = vector.shape_cast %10 : vector<16xf32> to vector<16x1xf32>
    %12 = tpu.iota {dimensions = array<i32: 1>} : vector<16x128xi32>
    %13 = vector.broadcast %11 : vector<16x1xf32> to vector<16x128xf32>
    %14 = arith.cmpf ole, %9, %13 : vector<16x128xf32>
    %c128_i32 = arith.constant 128 : i32
    %15 = vector.broadcast %c128_i32 : i32 to vector<16x128xi32>
    %16 = arith.select %14, %12, %15 : vector<16x128xi1>, vector<16x128xi32>
    %cst_9 = arith.constant dense<2147483647> : vector<16xi32>
    %17 = vector.multi_reduction <minsi>, %16, %cst_9 [1] : vector<16x128xi32> to vector<16xi32>
    %18 = vector.shape_cast %17 : vector<16xi32> to vector<16x1xi32>
    %19 = vector.broadcast %18 : vector<16x1xi32> to vector<16x128xi32>
    %20 = arith.cmpi eq, %12, %19 : vector<16x128xi32>
    %21 = arith.extui %20 : vector<16x128xi1> to vector<16x128xi32>
    %22 = arith.sitofp %21 : vector<16x128xi32> to vector<16x128xf32>
    %23 = arith.truncf %22 : vector<16x128xf32> to vector<16x128xbf16>
    %cst_10 = arith.constant dense<0.000000e+00> : vector<16x128xf32>
    %24 = tpu.matmul %23, %1, %cst_10 {dimension_numbers = #tpu.dot_dimension_numbers<[1], [0], [0], [1], [0, 0, 1, 1], [], []>} : vector<16x128xbf16>, vector<128x128xbf16>, vector<16x128xf32> -> vector<16x128xf32>
    %cst_11 = arith.constant dense<0.000000e+00> : vector<16x128xf32>
    %25 = tpu.matmul %23, %2, %cst_11 {dimension_numbers = #tpu.dot_dimension_numbers<[1], [0], [0], [1], [0, 0, 1, 1], [], []>} : vector<16x128xbf16>, vector<128x128xbf16>, vector<16x128xf32> -> vector<16x128xf32>
    %26 = arith.addf %24, %25 : vector<16x128xf32>
    %27 = arith.subf %26, %0 : vector<16x128xf32>
    %28 = arith.mulf %27, %27 : vector<16x128xf32>
    %cst_12 = arith.constant dense<0.000000e+00> : vector<16xf32>
    %29 = vector.multi_reduction <add>, %28, %cst_12 [1] : vector<16x128xf32> to vector<16xf32>
    %30 = vector.shape_cast %29 : vector<16xf32> to vector<16x1xf32>
    %cst_13 = arith.constant 3.906250e-02 : f32
    %31 = vector.broadcast %cst_13 : f32 to vector<16x1xf32>
    %32 = arith.mulf %31, %30 : vector<16x1xf32>
    %c0_14 = arith.constant 0 : index
    %c0_15 = arith.constant 0 : index
    %33 = vector.load %arg5[%c0_14, %c0_15] : memref<16x128xf32, #tpu.memory_space<vmem>>, vector<16x128xf32>
    tpu.vector_store %arg5[%c0_14, %c0_15], %26 {strides = array<i32>} : memref<16x128xf32, #tpu.memory_space<vmem>>, vector<16x128xf32>,
    %c0_16 = arith.constant 0 : index
    %c0_17 = arith.constant 0 : index
    %34 = vector.load %arg6[%c0_16, %c0_17] : memref<16x1xf32, #tpu.memory_space<vmem>>, vector<16x1xf32>
    tpu.vector_store %arg6[%c0_16, %c0_17], %32 {strides = array<i32>} : memref<16x1xf32, #tpu.memory_space<vmem>>, vector<16x1xf32>,
    %c0_18 = arith.constant 0 : index
    %c0_19 = arith.constant 0 : index
    %35 = vector.load %arg7[%c0_18, %c0_19] : memref<16x1xi32, #tpu.memory_space<vmem>>, vector<16x1xi32>
    tpu.vector_store %arg7[%c0_18, %c0_19], %18 {strides = array<i32>} : memref<16x1xi32, #tpu.memory_space<vmem>>, vector<16x1xi32>,
    return
  }
  func.func @transform_0(%arg0: i32) -> (i32, i32) {
    %c0_i32 = arith.constant 0 : i32
    %c0_i32_0 = arith.constant 0 : i32
    return %arg0, %c0_i32 : i32, i32
  }
  func.func @transform_1(%arg0: i32) -> (i32, i32) {
    %c0_i32 = arith.constant 0 : i32
    %c0_i32_0 = arith.constant 0 : i32
    %c0_i32_1 = arith.constant 0 : i32
    return %c0_i32, %c0_i32_0 : i32, i32
  }
  func.func @transform_2(%arg0: i32) -> (i32, i32) {
    %c0_i32 = arith.constant 0 : i32
    %c0_i32_0 = arith.constant 0 : i32
    %c0_i32_1 = arith.constant 0 : i32
    return %c0_i32, %c0_i32_0 : i32, i32
  }
  func.func @transform_3(%arg0: i32) -> (i32, i32) {
    %c0_i32 = arith.constant 0 : i32
    %c0_i32_0 = arith.constant 0 : i32
    %c0_i32_1 = arith.constant 0 : i32
    return %c0_i32, %c0_i32_0 : i32, i32
  }
  func.func @transform_4(%arg0: i32) -> (i32, i32) {
    %c0_i32 = arith.constant 0 : i32
    %c0_i32_0 = arith.constant 0 : i32
    return %arg0, %c0_i32 : i32, i32
  }
  func.func @transform_5(%arg0: i32) -> (i32, i32) {
    %c0_i32 = arith.constant 0 : i32
    %c0_i32_0 = arith.constant 0 : i32
    return %arg0, %c0_i32 : i32, i32
  }
  func.func @transform_6(%arg0: i32) -> (i32, i32) {
    %c0_i32 = arith.constant 0 : i32
    %c0_i32_0 = arith.constant 0 : i32
    return %arg0, %c0_i32 : i32, i32
  }
}

</mosaic_0001>

<llo_original>
// kernel: squeeze.2
$region0: #{squeeze.2}
  %s0 = inlined_call_operand.vmem [shape: f32[16], index: 0, kind: input, shape index: {}]
  %s1 = inlined_call_operand.hbm [shape: f32[2,8], index: 1, kind: output, shape index: {}]
  $region1: #{squeeze.2} parent=0
    #allocation0 [shape = 'u8[1024]{0}', space=vmem, size = 0x400, scoped, tag = 'operand span for operand 1']
    #allocation1 [shape = 's32[1]{0}', space=sflag, size = 0x4, scoped, tag = 'scoped memory for squeeze.2']
    #allocation2 [shape = 'u8[4096]{0}', space=vmem, size = 0x1000, scoped, tag = 'scoped mem for output reshape']
    #allocation3 [shape = 'u8[4096]{0}', space=vmem, size = 0x1000, scoped, tag = 'scoped mem for input reshape']
    %2 = vsyncpa [#allocation1], 0
    %s4 = ssub.s32 2, 1
    %v5 = vld [vmem:[%s0] sm:%s4]
    %6 = vst [vmem:[#allocation3] sm:%s4] %v5
    %v7 = vld [vmem:[#allocation3] sm:$0x1]
    %vm8 = vcmask 64512
    %9 = vst.msk [vmem:[#allocation2] sm:$0x1] %vm8, %v7
    %v10 = vld [vmem:[#allocation3] sm:$0x1]
    %11 = vrot.lane.b32.xlu0 %v10, 120
    %v12 = vpop.permute.xlu0 %11
    %vm13 = vcmask 64512
    %s14 = scalar_lea.vmem [#allocation2], 1
    %15 = vst.msk [vmem:[%s14] sm:$0x1] %vm13, %v12
    %s17 = ssub.s32 4, 1
    %v18 = vld [vmem:[#allocation2] sm:%s17]
    %s20 = ssub.s32 4, 1
    %21 = vst [vmem:[#allocation0] sm:%s20] %v18
    %23 = vsyncadd [#allocation1], 0
    %s25 = sshll.u32 [#allocation0], 4
    %s26 = int_to_ptr.vmem [resolvable:$true] %s25
    %s27 = sshll.u32 %s1, 4
    %s28 = int_to_ptr.hbm [resolvable:$true] %s27
    %30 = dma.vmem_to_hbm [thread:$0]  %s26, 32, %s28, [#allocation1]
    %32 = dma.done [#allocation1], 32
    %33 = vsyncpa [#allocation1], 1

// kernel: _vq_forward.1
$region0: #{_vq_forward.1}
  #allocation0 [shape = 'u32[]', space=smem, size = 0x4, offset = 0x4, fixed_abs, tag = 'smem constant byte address 0x4 - core index']
  #allocation1 [shape = 'u32[72,128]{1,0:T(1,128)}', space=vmem, size = 0x9000, scoped, tag = 'internal scratch']
  %s0 = inlined_call_operand.vmem [shape: f32[16,128], index: 0, kind: input, shape index: {}]
  %s1 = inlined_call_operand.vmem [shape: bf16[128,128], index: 1, kind: input, shape index: {}]
  %s2 = inlined_call_operand.vmem [shape: bf16[128,128], index: 2, kind: input, shape index: {}]
  %s3 = inlined_call_operand.vmem [shape: f32[1,128], index: 3, kind: input, shape index: {}]
  %s4 = inlined_call_operand.vmem [shape: f32[16,128], index: 4, kind: output, shape index: {0}]
  %s5 = inlined_call_operand.vmem [shape: f32[16,1], index: 5, kind: output, shape index: {1}]
  %s6 = inlined_call_operand.vmem [shape: s32[16,1], index: 6, kind: output, shape index: {2}]
  %7 = xla_tuple %s4, %s5, %s6
  %s8 = sld [smem:[#allocation0]]
  $region42: #{_vq_forward.1} parent=0
    _
  %s10 = ssub.s32 1, %s8
  %s11 = scalar_select 0, %s10, %s8
  // Predicated region
  $region2: #{_vq_forward.1} parent=0 // pred_check
    _
  $region3: #{_vq_forward.1} parent=0 // pred_check_branch
    %13 = sbr.rel (0) target = $region5
  $region4: #{_vq_forward.1} parent=0 // pred_region
    _
  $region5: #{_vq_forward.1} parent=0 // pred_fallthru
    _
  // Predicated region
  $region6: #{_vq_forward.1} parent=0 // pred_check
    _
  $region7: #{_vq_forward.1} parent=0 // pred_check_branch
    %15 = sbr.rel (0) target = $region9
  $region8: #{_vq_forward.1} parent=0 // pred_region
    _
  $region9: #{_vq_forward.1} parent=0 // pred_fallthru
    _
  // Predicated region
  $region10: #{_vq_forward.1} parent=0 // pred_check
    _
  $region11: #{_vq_forward.1} parent=0 // pred_check_branch
    %17 = sbr.rel (0) target = $region13
  $region12: #{_vq_forward.1} parent=0 // pred_region
    _
  $region13: #{_vq_forward.1} parent=0 // pred_fallthru
    _
  // Predicated region
  $region14: #{_vq_forward.1} parent=0 // pred_check
    _
  $region15: #{_vq_forward.1} parent=0 // pred_check_branch
    %19 = sbr.rel (0) target = $region17
  $region16: #{_vq_forward.1} parent=0 // pred_region
    _
  $region17: #{_vq_forward.1} parent=0 // pred_fallthru
    _
  %v20 = vld [vmem:[%s0] sm:$0xff]
  %v21 = vld [vmem:[%s0 + $0x8] sm:$0xff]
  %v22 = vld [vmem:[%s1] sm:$0xf]
  %v23 = vld [vmem:[%s1 + $0x4] sm:$0xf]
  %v24 = vld [vmem:[%s1 + $0x8] sm:$0xf]
  %v25 = vld [vmem:[%s1 + $0xc] sm:$0xf]
  %v26 = vld [vmem:[%s1 + $0x10] sm:$0xf]
  %v27 = vld [vmem:[%s1 + $0x14] sm:$0xf]
  %v28 = vld [vmem:[%s1 + $0x18] sm:$0xf]
  %v29 = vld [vmem:[%s1 + $0x1c] sm:$0xf]
  %v30 = vld [vmem:[%s1 + $0x20] sm:$0xf]
  %v31 = vld [vmem:[%s1 + $0x24] sm:$0xf]
  %v32 = vld [vmem:[%s1 + $0x28] sm:$0xf]
  %v33 = vld [vmem:[%s1 + $0x2c] sm:$0xf]
  %v34 = vld [vmem:[%s1 + $0x30] sm:$0xf]
  %v35 = vld [vmem:[%s1 + $0x34] sm:$0xf]
  %v36 = vld [vmem:[%s1 + $0x38] sm:$0xf]
  %v37 = vld [vmem:[%s1 + $0x3c] sm:$0xf]
  %v38 = vld [vmem:[%s2] sm:$0xf]
  %v39 = vld [vmem:[%s2 + $0x4] sm:$0xf]
  %v40 = vld [vmem:[%s2 + $0x8] sm:$0xf]
  %v41 = vld [vmem:[%s2 + $0xc] sm:$0xf]
  %v42 = vld [vmem:[%s2 + $0x10] sm:$0xf]
  %v43 = vld [vmem:[%s2 + $0x14] sm:$0xf]
  %v44 = vld [vmem:[%s2 + $0x18] sm:$0xf]
  %v45 = vld [vmem:[%s2 + $0x1c] sm:$0xf]
  %v46 = vld [vmem:[%s2 + $0x20] sm:$0xf]
  %v47 = vld [vmem:[%s2 + $0x24] sm:$0xf]
  %v48 = vld [vmem:[%s2 + $0x28] sm:$0xf]
  %v49 = vld [vmem:[%s2 + $0x2c] sm:$0xf]
  %v50 = vld [vmem:[%s2 + $0x30] sm:$0xf]
  %v51 = vld [vmem:[%s2 + $0x34] sm:$0xf]
  %v52 = vld [vmem:[%s2 + $0x38] sm:$0xf]
  %v53 = vld [vmem:[%s2 + $0x3c] sm:$0xf]
  %v54 = vld [vmem:[%s3] sm:$0x1]
  %v55 = vmul.f32 %v20, -2.0
  %v56 = vmul.f32 %v21, -2.0
  %v57 = vpack.c.bf16 %v56, %v55
  %v74 = vunpack.c.l.b16 %v22
  %v75 = vunpack.c.l.b16 %v23
  %v76 = vunpack.c.l.b16 %v24
  %v77 = vunpack.c.l.b16 %v25
  %v78 = vunpack.c.l.b16 %v26
  %v79 = vunpack.c.l.b16 %v27
  %v80 = vunpack.c.l.b16 %v28
  %v81 = vunpack.c.l.b16 %v29
  %v82 = vunpack.c.l.b16 %v30
  %v83 = vunpack.c.l.b16 %v31
  %v84 = vunpack.c.l.b16 %v32
  %v85 = vunpack.c.l.b16 %v33
  %v86 = vunpack.c.l.b16 %v34
  %v87 = vunpack.c.l.b16 %v35
  %v88 = vunpack.c.l.b16 %v36
  %v89 = vunpack.c.l.b16 %v37
  %v90 = vpack.c.b16 %v75, %v74
  %v91 = vpack.c.b16 %v77, %v76
  %v92 = vpack.c.b16 %v79, %v78
  %v93 = vpack.c.b16 %v81, %v80
  %v94 = vpack.c.b16 %v83, %v82
  %v95 = vpack.c.b16 %v85, %v84
  %v96 = vpack.c.b16 %v87, %v86
  %v97 = vpack.c.b16 %v89, %v88
  %106 = vmatpush.bf16.xpose.msra.mxu0 %v97
  %107 = vmatpush.bf16.xpose.msra.mxu0 %v96
  %108 = vmatpush.bf16.xpose.msra.mxu0 %v95
  %109 = vmatpush.bf16.xpose.msra.mxu0 %v94
  %110 = vmatpush.bf16.xpose.msra.mxu0 %v93
  %111 = vmatpush.bf16.xpose.msra.mxu0 %v92
  %112 = vmatpush.bf16.xpose.msra.mxu0 %v91
  %113 = vmatpush.bf16.xpose.msra.mxu0 %v90
  %114 = vmatmul.bf16.gmra.mxu0 %v57
  %v115 = vpop.f32.mrf.mxu0
  %v116 = vadd.f32 0.0, %v115
  %v117 = vpop.f32.mrf.mxu0
  %v118 = vadd.f32 0.0, %v117
  %119 = vdwg.mxu0
  %v121 = vperm.slane %v54, 0
  %v123 = vadd.f32 %v121, %v116
  %v124 = vadd.f32 %v121, %v118
  %125 = vmin.xlane.f32.xlu0 %v123
  %v126 = vpop.xlane.xlu0 %125
  %127 = vmin.xlane.f32.xlu0 %v124
  %v128 = vpop.xlane.xlu0 %127
  %v129 = vlaneseq
  %v130 = vand.u32 %v129, 127
  %vm131 = vcmp.le.f32.partialorder %v123, %v126
  %vm132 = vcmp.le.f32.partialorder %v124, %v128
  %v133 = vsel %vm131, %v130, 128
  %v134 = vsel %vm132, %v130, 128
  %v135 = vand.u32 %v133, 65535
  %v136 = vshra.s32 %v133, 16
  %v137 = vcvt.s32.f32 %v135
  %v138 = vcvt.s32.f32 %v136
  %139 = vmin.xlane.f32.xlu0 %v138
  %v140 = vpop.xlane.xlu0 %139
  %vm141 = vcmp.eq.f32.partialorder %v138, %v140
  %v142 = vsel %vm141, %v137, inf
  %143 = vmin.xlane.f32.xlu0 %v142
  %v144 = vpop.xlane.xlu0 %143
  %v145 = vcvt.f32.s32 %v144
  %v146 = vcvt.f32.s32 %v140
  %v147 = vshll.u32 %v146, 16
  %v148 = vadd.s32 %v147, %v145
  %v149 = vand.u32 %v134, 65535
  %v150 = vshra.s32 %v134, 16
  %v151 = vcvt.s32.f32 %v149
  %v152 = vcvt.s32.f32 %v150
  %153 = vmin.xlane.f32.xlu0 %v152
  %v154 = vpop.xlane.xlu0 %153
  %vm155 = vcmp.eq.f32.partialorder %v152, %v154
  %v156 = vsel %vm155, %v151, inf
  %157 = vmin.xlane.f32.xlu0 %v156
  %v158 = vpop.xlane.xlu0 %157
  %v159 = vcvt.f32.s32 %v158
  %v160 = vcvt.f32.s32 %v154
  %v161 = vshll.u32 %v160, 16
  %v162 = vadd.s32 %v161, %v159
  %vm163 = vcmp.eq.s32.totalorder %v130, %v148
  %vm164 = vcmp.eq.s32.totalorder %v130, %v162
  %v165 = vsel %vm163, 1, 0
  %v166 = vsel %vm164, 1, 0
  %v167 = vcvt.s32.f32 %v165
  %v168 = vcvt.s32.f32 %v166
  %v169 = vpack.c.bf16 %v168, %v167
  %v186 = vunpack.c.l.b16 %v38
  %v187 = vunpack.c.l.b16 %v39
  %v188 = vunpack.c.l.b16 %v40
  %v189 = vunpack.c.l.b16 %v41
  %v190 = vunpack.c.l.b16 %v42
  %v191 = vunpack.c.l.b16 %v43
  %v192 = vunpack.c.l.b16 %v44
  %v193 = vunpack.c.l.b16 %v45
  %v194 = vunpack.c.l.b16 %v46
  %v195 = vunpack.c.l.b16 %v47
  %v196 = vunpack.c.l.b16 %v48
  %v197 = vunpack.c.l.b16 %v49
  %v198 = vunpack.c.l.b16 %v50
  %v199 = vunpack.c.l.b16 %v51
  %v200 = vunpack.c.l.b16 %v52
  %v201 = vunpack.c.l.b16 %v53
  %v202 = vpack.c.b16 %v187, %v186
  %v203 = vpack.c.b16 %v189, %v188
  %v204 = vpack.c.b16 %v191, %v190
  %v205 = vpack.c.b16 %v193, %v192
  %v206 = vpack.c.b16 %v195, %v194
  %v207 = vpack.c.b16 %v197, %v196
  %v208 = vpack.c.b16 %v199, %v198
  %v209 = vpack.c.b16 %v201, %v200
  %218 = vmatpush.bf16.msra.mxu0 %v209
  %219 = vmatpush.bf16.msra.mxu0 %v208
  %220 = vmatpush.bf16.msra.mxu0 %v207
  %221 = vmatpush.bf16.msra.mxu0 %v206
  %222 = vmatpush.bf16.msra.mxu0 %v205
  %223 = vmatpush.bf16.msra.mxu0 %v204
  %224 = vmatpush.bf16.msra.mxu0 %v203
  %225 = vmatpush.bf16.msra.mxu0 %v202
  %226 = vmatmul.bf16.gmra.mxu0 %v169
  %v227 = vpop.f32.mrf.mxu0
  %v228 = vadd.f32 0.0, %v227
  %v229 = vpop.f32.mrf.mxu0
  %v230 = vadd.f32 0.0, %v229
  %231 = vdwg.mxu0
  %232 = vmatpush.bf16.msra.mxu0 %v97
  %233 = vmatpush.bf16.msra.mxu0 %v96
  %234 = vmatpush.bf16.msra.mxu0 %v95
  %235 = vmatpush.bf16.msra.mxu0 %v94
  %236 = vmatpush.bf16.msra.mxu0 %v93
  %237 = vmatpush.bf16.msra.mxu0 %v92
  %238 = vmatpush.bf16.msra.mxu0 %v91
  %239 = vmatpush.bf16.msra.mxu0 %v90
  %240 = vmatmul.bf16.gmra.mxu0 %v169
  %v241 = vpop.f32.mrf.mxu0
  %v242 = vadd.f32 %v228, %v241
  %v243 = vpop.f32.mrf.mxu0
  %v244 = vadd.f32 %v230, %v243
  %245 = vdwg.mxu0
  %v246 = vsub.f32 %v242, %v20
  %v247 = vsub.f32 %v244, %v21
  %v248 = vmul.f32 %v246, %v246
  %v249 = vmul.f32 %v247, %v247
  %250 = vadd.xlane.f32.xlu0 %v248
  %v251 = vpop.xlane.xlu0 %250
  %252 = vadd.xlane.f32.xlu0 %v249
  %v253 = vpop.xlane.xlu0 %252
  %v254 = vmul.f32 %v251, 0.0390625
  %v255 = vmul.f32 %v253, 0.0390625
  %256 = vst [vmem:[%s4] sm:$0xff] %v242
  %257 = vst [vmem:[%s4 + $0x8] sm:$0xff] %v244
  %vm258 = vcmask 7168
  %259 = vst.msk [vmem:[%s5] sm:$0xff] %vm258, %v254
  %260 = vst.msk [vmem:[%s5 + $0x8] sm:$0xff] %vm258, %v255
  %261 = vst.msk [vmem:[%s6] sm:$0xff] %vm258, %v148
  %262 = vst.msk [vmem:[%s6 + $0x8] sm:$0xff] %vm258, %v162
  // Predicated region
  $region18: #{_vq_forward.1} parent=0 // pred_check
    _
  $region19: #{_vq_forward.1} parent=0 // pred_check_branch
    %264 = sbr.rel (0) target = $region21
  $region20: #{_vq_forward.1} parent=0 // pred_region
    _
  $region21: #{_vq_forward.1} parent=0 // pred_fallthru
    _
  // Predicated region
  $region22: #{_vq_forward.1} parent=0 // pred_check
    _
  $region23: #{_vq_forward.1} parent=0 // pred_check_branch
    %266 = sbr.rel (0) target = $region25
  $region24: #{_vq_forward.1} parent=0 // pred_region
    _
  $region25: #{_vq_forward.1} parent=0 // pred_fallthru
    _
  // Predicated region
  $region26: #{_vq_forward.1} parent=0 // pred_check
    _
  $region27: #{_vq_forward.1} parent=0 // pred_check_branch
    %268 = sbr.rel (0) target = $region29
  $region28: #{_vq_forward.1} parent=0 // pred_region
    _
  $region29: #{_vq_forward.1} parent=0 // pred_fallthru
    _
  // Predicated region
  $region30: #{_vq_forward.1} parent=0 // pred_check
    _
  $region31: #{_vq_forward.1} parent=0 // pred_check_branch
    %270 = sbr.rel (0) target = $region33
  $region32: #{_vq_forward.1} parent=0 // pred_region
    _
  $region33: #{_vq_forward.1} parent=0 // pred_fallthru
    _
  // Predicated region
  $region34: #{_vq_forward.1} parent=0 // pred_check
    _
  $region35: #{_vq_forward.1} parent=0 // pred_check_branch
    %272 = sbr.rel (0) target = $region37
  $region36: #{_vq_forward.1} parent=0 // pred_region
    _
  $region37: #{_vq_forward.1} parent=0 // pred_fallthru
    _
  // Predicated region
  $region38: #{_vq_forward.1} parent=0 // pred_check
    _
  $region39: #{_vq_forward.1} parent=0 // pred_check_branch
    %274 = sbr.rel (0) target = $region41
  $region40: #{_vq_forward.1} parent=0 // pred_region
    _
  $region41: #{_vq_forward.1} parent=0 // pred_fallthru
    _

// kernel: squeeze.2
$region0: #{squeeze.2}
  %s0 = inlined_call_operand.vmem [shape: f32[16], index: 0, kind: input, shape index: {}]
  %s1 = inlined_call_operand.hbm [shape: f32[2,8], index: 1, kind: output, shape index: {}]
  $region1: #{squeeze.2} parent=0
    #allocation0 [shape = 'u8[1024]{0}', space=vmem, size = 0x400, scoped, tag = 'operand span for operand 1']
    #allocation1 [shape = 's32[1]{0}', space=sflag, size = 0x4, scoped, tag = 'scoped memory for squeeze.2']
    #allocation2 [shape = 'u8[4096]{0}', space=vmem, size = 0x1000, scoped, tag = 'scoped mem for output reshape']
    #allocation3 [shape = 'u8[4096]{0}', space=vmem, size = 0x1000, scoped, tag = 'scoped mem for input reshape']
    %2 = vsyncpa [#allocation1], 0
    %s4 = ssub.s32 2, 1
    %v5 = vld [vmem:[%s0] sm:%s4]
    %6 = vst [vmem:[#allocation3] sm:%s4] %v5
    %v7 = vld [vmem:[#allocation3] sm:$0x1]
    %vm8 = vcmask 64512
    %9 = vst.msk [vmem:[#allocation2] sm:$0x1] %vm8, %v7
    %v10 = vld [vmem:[#allocation3] sm:$0x1]
    %11 = vrot.lane.b32.xlu0 %v10, 120
    %v12 = vpop.permute.xlu0 %11
    %vm13 = vcmask 64512
    %s14 = scalar_lea.vmem [#allocation2], 1
    %15 = vst.msk [vmem:[%s14] sm:$0x1] %vm13, %v12
    %s17 = ssub.s32 4, 1
    %v18 = vld [vmem:[#allocation2] sm:%s17]
    %s20 = ssub.s32 4, 1
    %21 = vst [vmem:[#allocation0] sm:%s20] %v18
    %23 = vsyncadd [#allocation1], 0
    %s25 = sshll.u32 [#allocation0], 4
    %s26 = int_to_ptr.vmem [resolvable:$true] %s25
    %s27 = sshll.u32 %s1, 4
    %s28 = int_to_ptr.hbm [resolvable:$true] %s27
    %30 = dma.vmem_to_hbm [thread:$0]  %s26, 32, %s28, [#allocation1]
    %32 = dma.done [#allocation1], 32
    %33 = vsyncpa [#allocation1], 1

// kernel: _vq_forward.1
$region0: #{_vq_forward.1}
  #allocation0 [shape = 'u32[]', space=smem, size = 0x4, offset = 0x4, fixed_abs, tag = 'smem constant byte address 0x4 - core index']
  #allocation1 [shape = 'u32[72,128]{1,0:T(1,128)}', space=vmem, size = 0x9000, scoped, tag = 'internal scratch']
  %s0 = inlined_call_operand.vmem [shape: f32[16,128], index: 0, kind: input, shape index: {}]
  %s1 = inlined_call_operand.vmem [shape: bf16[128,128], index: 1, kind: input, shape index: {}]
  %s2 = inlined_call_operand.vmem [shape: bf16[128,128], index: 2, kind: input, shape index: {}]
  %s3 = inlined_call_operand.vmem [shape: f32[1,128], index: 3, kind: input, shape index: {}]
  %s4 = inlined_call_operand.vmem [shape: f32[16,128], index: 4, kind: output, shape index: {0}]
  %s5 = inlined_call_operand.vmem [shape: f32[16,1], index: 5, kind: output, shape index: {1}]
  %s6 = inlined_call_operand.vmem [shape: s32[16,1], index: 6, kind: output, shape index: {2}]
  %7 = xla_tuple %s4, %s5, %s6
  %s8 = sld [smem:[#allocation0]]
  $region42: #{_vq_forward.1} parent=0
    _
  %s10 = ssub.s32 1, %s8
  %s11 = scalar_select 0, %s10, %s8
  // Predicated region
  $region2: #{_vq_forward.1} parent=0 // pred_check
    _
  $region3: #{_vq_forward.1} parent=0 // pred_check_branch
    %13 = sbr.rel (0) target = $region5
  $region4: #{_vq_forward.1} parent=0 // pred_region
    _
  $region5: #{_vq_forward.1} parent=0 // pred_fallthru
    _
  // Predicated region
  $region6: #{_vq_forward.1} parent=0 // pred_check
    _
  $region7: #{_vq_forward.1} parent=0 // pred_check_branch
    %15 = sbr.rel (0) target = $region9
  $region8: #{_vq_forward.1} parent=0 // pred_region
    _
  $region9: #{_vq_forward.1} parent=0 // pred_fallthru
    _
  // Predicated region
  $region10: #{_vq_forward.1} parent=0 // pred_check
    _
  $region11: #{_vq_forward.1} parent=0 // pred_check_branch
    %17 = sbr.rel (0) target = $region13
  $region12: #{_vq_forward.1} parent=0 // pred_region
    _
  $region13: #{_vq_forward.1} parent=0 // pred_fallthru
    _
  // Predicated region
  $region14: #{_vq_forward.1} parent=0 // pred_check
    _
  $region15: #{_vq_forward.1} parent=0 // pred_check_branch
    %19 = sbr.rel (0) target = $region17
  $region16: #{_vq_forward.1} parent=0 // pred_region
    _
  $region17: #{_vq_forward.1} parent=0 // pred_fallthru
    _
  %v20 = vld [vmem:[%s0] sm:$0xff]
  %v21 = vld [vmem:[%s0 + $0x8] sm:$0xff]
  %v22 = vld [vmem:[%s1] sm:$0xf]
  %v23 = vld [vmem:[%s1 + $0x4] sm:$0xf]
  %v24 = vld [vmem:[%s1 + $0x8] sm:$0xf]
  %v25 = vld [vmem:[%s1 + $0xc] sm:$0xf]
  %v26 = vld [vmem:[%s1 + $0x10] sm:$0xf]
  %v27 = vld [vmem:[%s1 + $0x14] sm:$0xf]
  %v28 = vld [vmem:[%s1 + $0x18] sm:$0xf]
  %v29 = vld [vmem:[%s1 + $0x1c] sm:$0xf]
  %v30 = vld [vmem:[%s1 + $0x20] sm:$0xf]
  %v31 = vld [vmem:[%s1 + $0x24] sm:$0xf]
  %v32 = vld [vmem:[%s1 + $0x28] sm:$0xf]
  %v33 = vld [vmem:[%s1 + $0x2c] sm:$0xf]
  %v34 = vld [vmem:[%s1 + $0x30] sm:$0xf]
  %v35 = vld [vmem:[%s1 + $0x34] sm:$0xf]
  %v36 = vld [vmem:[%s1 + $0x38] sm:$0xf]
  %v37 = vld [vmem:[%s1 + $0x3c] sm:$0xf]
  %v38 = vld [vmem:[%s2] sm:$0xf]
  %v39 = vld [vmem:[%s2 + $0x4] sm:$0xf]
  %v40 = vld [vmem:[%s2 + $0x8] sm:$0xf]
  %v41 = vld [vmem:[%s2 + $0xc] sm:$0xf]
  %v42 = vld [vmem:[%s2 + $0x10] sm:$0xf]
  %v43 = vld [vmem:[%s2 + $0x14] sm:$0xf]
  %v44 = vld [vmem:[%s2 + $0x18] sm:$0xf]
  %v45 = vld [vmem:[%s2 + $0x1c] sm:$0xf]
  %v46 = vld [vmem:[%s2 + $0x20] sm:$0xf]
  %v47 = vld [vmem:[%s2 + $0x24] sm:$0xf]
  %v48 = vld [vmem:[%s2 + $0x28] sm:$0xf]
  %v49 = vld [vmem:[%s2 + $0x2c] sm:$0xf]
  %v50 = vld [vmem:[%s2 + $0x30] sm:$0xf]
  %v51 = vld [vmem:[%s2 + $0x34] sm:$0xf]
  %v52 = vld [vmem:[%s2 + $0x38] sm:$0xf]
  %v53 = vld [vmem:[%s2 + $0x3c] sm:$0xf]
  %v54 = vld [vmem:[%s3] sm:$0x1]
  %v55 = vmul.f32 %v20, -2.0
  %v56 = vmul.f32 %v21, -2.0
  %v57 = vpack.c.bf16 %v56, %v55
  %v74 = vunpack.c.l.b16 %v22
  %v75 = vunpack.c.l.b16 %v23
  %v76 = vunpack.c.l.b16 %v24
  %v77 = vunpack.c.l.b16 %v25
  %v78 = vunpack.c.l.b16 %v26
  %v79 = vunpack.c.l.b16 %v27
  %v80 = vunpack.c.l.b16 %v28
  %v81 = vunpack.c.l.b16 %v29
  %v82 = vunpack.c.l.b16 %v30
  %v83 = vunpack.c.l.b16 %v31
  %v84 = vunpack.c.l.b16 %v32
  %v85 = vunpack.c.l.b16 %v33
  %v86 = vunpack.c.l.b16 %v34
  %v87 = vunpack.c.l.b16 %v35
  %v88 = vunpack.c.l.b16 %v36
  %v89 = vunpack.c.l.b16 %v37
  %v90 = vpack.c.b16 %v75, %v74
  %v91 = vpack.c.b16 %v77, %v76
  %v92 = vpack.c.b16 %v79, %v78
  %v93 = vpack.c.b16 %v81, %v80
  %v94 = vpack.c.b16 %v83, %v82
  %v95 = vpack.c.b16 %v85, %v84
  %v96 = vpack.c.b16 %v87, %v86
  %v97 = vpack.c.b16 %v89, %v88
  %106 = vmatpush.bf16.xpose.msra.mxu0 %v97
  %107 = vmatpush.bf16.xpose.msra.mxu0 %v96
  %108 = vmatpush.bf16.xpose.msra.mxu0 %v95
  %109 = vmatpush.bf16.xpose.msra.mxu0 %v94
  %110 = vmatpush.bf16.xpose.msra.mxu0 %v93
  %111 = vmatpush.bf16.xpose.msra.mxu0 %v92
  %112 = vmatpush.bf16.xpose.msra.mxu0 %v91
  %113 = vmatpush.bf16.xpose.msra.mxu0 %v90
  %114 = vmatmul.bf16.gmra.mxu0 %v57
  %v115 = vpop.f32.mrf.mxu0
  %v116 = vadd.f32 0.0, %v115
  %v117 = vpop.f32.mrf.mxu0
  %v118 = vadd.f32 0.0, %v117
  %119 = vdwg.mxu0
  %v121 = vperm.slane %v54, 0
  %v123 = vadd.f32 %v121, %v116
  %v124 = vadd.f32 %v121, %v118
  %125 = vmin.xlane.f32.xlu0 %v123
  %v126 = vpop.xlane.xlu0 %125
  %127 = vmin.xlane.f32.xlu0 %v124
  %v128 = vpop.xlane.xlu0 %127
  %v129 = vlaneseq
  %v130 = vand.u32 %v129, 127
  %vm131 = vcmp.le.f32.partialorder %v123, %v126
  %vm132 = vcmp.le.f32.partialorder %v124, %v128
  %v133 = vsel %vm131, %v130, 128
  %v134 = vsel %vm132, %v130, 128
  %v135 = vand.u32 %v133, 65535
  %v136 = vshra.s32 %v133, 16
  %v137 = vcvt.s32.f32 %v135
  %v138 = vcvt.s32.f32 %v136
  %139 = vmin.xlane.f32.xlu0 %v138
  %v140 = vpop.xlane.xlu0 %139
  %vm141 = vcmp.eq.f32.partialorder %v138, %v140
  %v142 = vsel %vm141, %v137, inf
  %143 = vmin.xlane.f32.xlu0 %v142
  %v144 = vpop.xlane.xlu0 %143
  %v145 = vcvt.f32.s32 %v144
  %v146 = vcvt.f32.s32 %v140
  %v147 = vshll.u32 %v146, 16
  %v148 = vadd.s32 %v147, %v145
  %v149 = vand.u32 %v134, 65535
  %v150 = vshra.s32 %v134, 16
  %v151 = vcvt.s32.f32 %v149
  %v152 = vcvt.s32.f32 %v150
  %153 = vmin.xlane.f32.xlu0 %v152
  %v154 = vpop.xlane.xlu0 %153
  %vm155 = vcmp.eq.f32.partialorder %v152, %v154
  %v156 = vsel %vm155, %v151, inf
  %157 = vmin.xlane.f32.xlu0 %v156
  %v158 = vpop.xlane.xlu0 %157
  %v159 = vcvt.f32.s32 %v158
  %v160 = vcvt.f32.s32 %v154
  %v161 = vshll.u32 %v160, 16
  %v162 = vadd.s32 %v161, %v159
  %vm163 = vcmp.eq.s32.totalorder %v130, %v148
  %vm164 = vcmp.eq.s32.totalorder %v130, %v162
  %v165 = vsel %vm163, 1, 0
  %v166 = vsel %vm164, 1, 0
  %v167 = vcvt.s32.f32 %v165
  %v168 = vcvt.s32.f32 %v166
  %v169 = vpack.c.bf16 %v168, %v167
  %v186 = vunpack.c.l.b16 %v38
  %v187 = vunpack.c.l.b16 %v39
  %v188 = vunpack.c.l.b16 %v40
  %v189 = vunpack.c.l.b16 %v41
  %v190 = vunpack.c.l.b16 %v42
  %v191 = vunpack.c.l.b16 %v43
  %v192 = vunpack.c.l.b16 %v44
  %v193 = vunpack.c.l.b16 %v45
  %v194 = vunpack.c.l.b16 %v46
  %v195 = vunpack.c.l.b16 %v47
  %v196 = vunpack.c.l.b16 %v48
  %v197 = vunpack.c.l.b16 %v49
  %v198 = vunpack.c.l.b16 %v50
  %v199 = vunpack.c.l.b16 %v51
  %v200 = vunpack.c.l.b16 %v52
  %v201 = vunpack.c.l.b16 %v53
  %v202 = vpack.c.b16 %v187, %v186
  %v203 = vpack.c.b16 %v189, %v188
  %v204 = vpack.c.b16 %v191, %v190
  %v205 = vpack.c.b16 %v193, %v192
  %v206 = vpack.c.b16 %v195, %v194
  %v207 = vpack.c.b16 %v197, %v196
  %v208 = vpack.c.b16 %v199, %v198
  %v209 = vpack.c.b16 %v201, %v200
  %218 = vmatpush.bf16.msra.mxu0 %v209
  %219 = vmatpush.bf16.msra.mxu0 %v208
  %220 = vmatpush.bf16.msra.mxu0 %v207
  %221 = vmatpush.bf16.msra.mxu0 %v206
  %222 = vmatpush.bf16.msra.mxu0 %v205
  %223 = vmatpush.bf16.msra.mxu0 %v204
  %224 = vmatpush.bf16.msra.mxu0 %v203
  %225 = vmatpush.bf16.msra.mxu0 %v202
  %226 = vmatmul.bf16.gmra.mxu0 %v169
  %v227 = vpop.f32.mrf.mxu0
  %v228 = vadd.f32 0.0, %v227
  %v229 = vpop.f32.mrf.mxu0
  %v230 = vadd.f32 0.0, %v229
  %231 = vdwg.mxu0
  %232 = vmatpush.bf16.msra.mxu0 %v97
  %233 = vmatpush.bf16.msra.mxu0 %v96
  %234 = vmatpush.bf16.msra.mxu0 %v95
  %235 = vmatpush.bf16.msra.mxu0 %v94
  %236 = vmatpush.bf16.msra.mxu0 %v93
  %237 = vmatpush.bf16.msra.mxu0 %v92
  %238 = vmatpush.bf16.msra.mxu0 %v91
  %239 = vmatpush.bf16.msra.mxu0 %v90
  %240 = vmatmul.bf16.gmra.mxu0 %v169
  %v241 = vpop.f32.mrf.mxu0
  %v242 = vadd.f32 %v228, %v241
  %v243 = vpop.f32.mrf.mxu0
  %v244 = vadd.f32 %v230, %v243
  %245 = vdwg.mxu0
  %v246 = vsub.f32 %v242, %v20
  %v247 = vsub.f32 %v244, %v21
  %v248 = vmul.f32 %v246, %v246
  %v249 = vmul.f32 %v247, %v247
  %250 = vadd.xlane.f32.xlu0 %v248
  %v251 = vpop.xlane.xlu0 %250
  %252 = vadd.xlane.f32.xlu0 %v249
  %v253 = vpop.xlane.xlu0 %252
  %v254 = vmul.f32 %v251, 0.0390625
  %v255 = vmul.f32 %v253, 0.0390625
  %256 = vst [vmem:[%s4] sm:$0xff] %v242
  %257 = vst [vmem:[%s4 + $0x8] sm:$0xff] %v244
  %vm258 = vcmask 7168
  %259 = vst.msk [vmem:[%s5] sm:$0xff] %vm258, %v254
  %260 = vst.msk [vmem:[%s5 + $0x8] sm:$0xff] %vm258, %v255
  %261 = vst.msk [vmem:[%s6] sm:$0xff] %vm258, %v148
  %262 = vst.msk [vmem:[%s6 + $0x8] sm:$0xff] %vm258, %v162
  // Predicated region
  $region18: #{_vq_forward.1} parent=0 // pred_check
    _
  $region19: #{_vq_forward.1} parent=0 // pred_check_branch
    %264 = sbr.rel (0) target = $region21
  $region20: #{_vq_forward.1} parent=0 // pred_region
    _
  $region21: #{_vq_forward.1} parent=0 // pred_fallthru
    _
  // Predicated region
  $region22: #{_vq_forward.1} parent=0 // pred_check
    _
  $region23: #{_vq_forward.1} parent=0 // pred_check_branch
    %266 = sbr.rel (0) target = $region25
  $region24: #{_vq_forward.1} parent=0 // pred_region
    _
  $region25: #{_vq_forward.1} parent=0 // pred_fallthru
    _
  // Predicated region
  $region26: #{_vq_forward.1} parent=0 // pred_check
    _
  $region27: #{_vq_forward.1} parent=0 // pred_check_branch
    %268 = sbr.rel (0) target = $region29
  $region28: #{_vq_forward.1} parent=0 // pred_region
    _
  $region29: #{_vq_forward.1} parent=0 // pred_fallthru
    _
  // Predicated region
  $region30: #{_vq_forward.1} parent=0 // pred_check
    _
  $region31: #{_vq_forward.1} parent=0 // pred_check_branch
    %270 = sbr.rel (0) target = $region33
  $region32: #{_vq_forward.1} parent=0 // pred_region
    _
  $region33: #{_vq_forward.1} parent=0 // pred_fallthru
    _
  // Predicated region
  $region34: #{_vq_forward.1} parent=0 // pred_check
    _
  $region35: #{_vq_forward.1} parent=0 // pred_check_branch
    %272 = sbr.rel (0) target = $region37
  $region36: #{_vq_forward.1} parent=0 // pred_region
    _
  $region37: #{_vq_forward.1} parent=0 // pred_fallthru
    _
  // Predicated region
  $region38: #{_vq_forward.1} parent=0 // pred_check
    _
  $region39: #{_vq_forward.1} parent=0 // pred_check_branch
    %274 = sbr.rel (0) target = $region41
  $region40: #{_vq_forward.1} parent=0 // pred_region
    _
  $region41: #{_vq_forward.1} parent=0 // pred_fallthru
    _

</llo_original>
